<compile_context>
chip_gen: v5e
topology: v5e:2x2
jax: 0.10.0
libtpu: 0.0.40
codegen_flags: <defaults>
</compile_context>

<pallas_src>
import jax
import jax.numpy as jnp
from jax.experimental import pallas as pl
from jax.experimental.pallas import tpu as pltpu  # noqa: F401  (kept for TPU-specific tuning hooks)

BN_EPS = 1e-5


def _critic_kernel(state_ref, action_ref, w1_ref, w2_ref, misc_ref, out_ref):
    # misc rows: [b1, b2, w3_row, (b3, 0, 0, ...)]
    misc = misc_ref[...]                       # (4, 64)
    b1 = misc[0:1, :]                          # (1, 64)
    b2 = misc[1:2, :]                          # (1, 64)
    w3_row = misc[2:3, :]                      # (1, 64)
    b3 = misc[3:4, 0:1]                        # (1, 1)

    n0 = w2_ref.shape[1]                       # hidden width (64)
    a_dim = w2_ref.shape[0] - n0               # action_size

    # ---- model_input: Linear -> ReLU -> BatchNorm1d (training mode, batch stats) ----
    h = jnp.dot(state_ref[...], w1_ref[...],
                preferred_element_type=jnp.float32) + b1
    h = jnp.maximum(h, 0.0)

    mean = jnp.mean(h, axis=0, keepdims=True)
    var = jnp.mean((h - mean) ** 2, axis=0, keepdims=True)   # biased var (PyTorch BN fwd)
    h = (h - mean) * jax.lax.rsqrt(var + BN_EPS)             # gamma=1, beta=0 (default init)

    # ---- model_output layer 2: cat[h, action] @ W2 + b2, split as ----
    #   h @ W2[:64]        -> one MXU matmul (K=64, N=64)
    #   action @ W2[64:]   -> a_dim broadcast FMAs on the VPU (no 2nd MXU push)
    z = jnp.dot(h, w2_ref[pl.ds(0, n0), :],
                preferred_element_type=jnp.float32) + b2
    action = action_ref[...]                   # (B, a_dim)
    w2a = w2_ref[pl.ds(n0, a_dim), :]          # (a_dim, 64)
    for j in range(a_dim):                     # static, a_dim is tiny (e.g. 4)
        z = z + action[:, j:j + 1] * w2a[j:j + 1, :]
    z = jnp.maximum(z, 0.0)

    # ---- layer 3 (64 -> 1): VPU multiply + XLU lane reduce instead of an N=1 MXU matmul ----
    out_ref[...] = jnp.sum(z * w3_row, axis=-1, keepdims=True) + b3


def critic_forward(state, action, params):
    """state: (B, S) f32, action: (B, A) f32 -> (B, 1) f32."""
    B = state.shape[0]
    w1, w2, misc = params

    def full(shape):
        return pl.BlockSpec(shape, lambda: tuple(0 for _ in shape))

    args = (state, action, w1, w2, misc)
    return pl.pallas_call(
        _critic_kernel,
        out_shape=jax.ShapeDtypeStruct((B, 1), jnp.float32),
        grid=(),
        in_specs=[full(a.shape) for a in args],
        out_specs=full((B, 1)),
    )(*args)


def _xavier_uniform(key, fan_in, fan_out):
    # matches torch.nn.init.xavier_uniform_ on a (fan_out, fan_in) weight,
    # returned already transposed to (fan_in, fan_out)
    bound = (6.0 / (fan_in + fan_out)) ** 0.5
    return jax.random.uniform(key, (fan_in, fan_out), jnp.float32, -bound, bound)


def init_critic_params(key, state_size, action_size, nodes=(64, 64)):
    n0, n1 = nodes
    assert n0 == n1, "packed misc slab assumes nodes[0] == nodes[1]"
    k1, k2, k3 = jax.random.split(key, 3)

    w1 = _xavier_uniform(k1, state_size, n0)                  # (S, 64)
    w2 = _xavier_uniform(k2, n0 + action_size, n1)            # (64+A, 64)
    w3 = _xavier_uniform(k3, n1, 1)                           # (64, 1)

    # Pack biases + final weight row into one (4, 64) slab -> fewer tiny DMAs.
    misc = jnp.zeros((4, n1), jnp.float32)
    misc = misc.at[0, :].set(0.1)                             # b1
    misc = misc.at[1, :].set(0.1)                             # b2
    misc = misc.at[2, :].set(w3[:, 0])                        # W3 as a row
    misc = misc.at[3, 0].set(0.1)                             # b3
    return (w1, w2, misc)


def critic_reference(state, action, params):
    """Pure-JAX reference of the same forward, for a sanity check."""
    w1, w2, misc = params
    b1 = misc[0:1, :]
    b2 = misc[1:2, :]
    w3 = misc[2:3, :].T            # (64, 1)
    b3 = misc[3, 0]

    h = jnp.maximum(state @ w1 + b1, 0.0)
    mean = jnp.mean(h, axis=0, keepdims=True)
    var = jnp.mean((h - mean) ** 2, axis=0, keepdims=True)
    h = (h - mean) * jax.lax.rsqrt(var + BN_EPS)

    x = jnp.concatenate([h, action], axis=1)
    z = jnp.maximum(x @ w2 + b2, 0.0)
    return z @ w3 + b3


if __name__ == "__main__":
    STATE_SIZE, ACTION_SIZE, BATCH = 16, 4, 8

    key = jax.random.PRNGKey(0)
    kp, ks, ka = jax.random.split(key, 3)

    params = init_critic_params(kp, STATE_SIZE, ACTION_SIZE, nodes=(64, 64))
    state = jax.random.normal(ks, (BATCH, STATE_SIZE), jnp.float32)
    action = jax.random.normal(ka, (BATCH, ACTION_SIZE), jnp.float32)

    out = critic_forward(state, action, params)
    out = jax.block_until_ready(out)

    ref = critic_reference(state, action, params)
    assert out.shape == (BATCH, 1)
    assert jnp.allclose(out, ref, atol=1e-4, rtol=1e-4)

    print("KERNEL_OK")
</pallas_src>

<mosaic_0001>
module attributes {stable_mosaic.version = 11 : i64} {
  func.func @_critic_kernel(%arg0: memref<8x16xf32, #tpu.memory_space<vmem>>, %arg1: memref<8x4xf32, #tpu.memory_space<vmem>>, %arg2: memref<16x64xf32, #tpu.memory_space<vmem>>, %arg3: memref<68x64xf32, #tpu.memory_space<vmem>>, %arg4: memref<4x64xf32, #tpu.memory_space<vmem>>, %arg5: memref<8x1xf32, #tpu.memory_space<vmem>>) attributes {dimension_semantics = [], scalar_prefetch = 0 : i64, scratch_operands = 0 : i64, tpu.core_type = #tpu.core_type<tc>} {
    %c0 = arith.constant 0 : index
    %c0_0 = arith.constant 0 : index
    %0 = vector.load %arg4[%c0, %c0_0] : memref<4x64xf32, #tpu.memory_space<vmem>>, vector<4x64xf32>
    %1 = vector.extract_strided_slice %0 {offsets = [0, 0], sizes = [1, 64], strides = [1, 1]} : vector<4x64xf32> to vector<1x64xf32>
    %2 = vector.extract_strided_slice %0 {offsets = [1, 0], sizes = [1, 64], strides = [1, 1]} : vector<4x64xf32> to vector<1x64xf32>
    %3 = vector.extract_strided_slice %0 {offsets = [2, 0], sizes = [1, 64], strides = [1, 1]} : vector<4x64xf32> to vector<1x64xf32>
    %4 = vector.extract_strided_slice %0 {offsets = [3, 0], sizes = [1, 1], strides = [1, 1]} : vector<4x64xf32> to vector<1x1xf32>
    %c0_1 = arith.constant 0 : index
    %c0_2 = arith.constant 0 : index
    %5 = vector.load %arg0[%c0_1, %c0_2] : memref<8x16xf32, #tpu.memory_space<vmem>>, vector<8x16xf32>
    %c0_3 = arith.constant 0 : index
    %c0_4 = arith.constant 0 : index
    %6 = vector.load %arg2[%c0_3, %c0_4] : memref<16x64xf32, #tpu.memory_space<vmem>>, vector<16x64xf32>
    %cst = arith.constant dense<0.000000e+00> : vector<8x64xf32>
    %7 = tpu.matmul %5, %6, %cst {dimension_numbers = #tpu.dot_dimension_numbers<[1], [0], [0], [1], [0, 0, 1, 1], [], []>} : vector<8x16xf32>, vector<16x64xf32>, vector<8x64xf32> -> vector<8x64xf32>
    %8 = vector.broadcast %1 : vector<1x64xf32> to vector<8x64xf32>
    %9 = arith.addf %7, %8 : vector<8x64xf32>
    %cst_5 = arith.constant 0.000000e+00 : f32
    %10 = vector.broadcast %cst_5 : f32 to vector<8x64xf32>
    %11 = arith.maximumf %9, %10 : vector<8x64xf32>
    %cst_6 = arith.constant dense<0.000000e+00> : vector<64xf32>
    %12 = vector.multi_reduction <add>, %11, %cst_6 [0] : vector<8x64xf32> to vector<64xf32>
    %13 = vector.shape_cast %12 : vector<64xf32> to vector<1x64xf32>
    %cst_7 = arith.constant 8.000000e+00 : f32
    %14 = vector.broadcast %cst_7 : f32 to vector<1x64xf32>
    %15 = arith.divf %13, %14 : vector<1x64xf32>
    %16 = vector.broadcast %15 : vector<1x64xf32> to vector<8x64xf32>
    %17 = arith.subf %11, %16 : vector<8x64xf32>
    %18 = arith.mulf %17, %17 : vector<8x64xf32>
    %cst_8 = arith.constant dense<0.000000e+00> : vector<64xf32>
    %19 = vector.multi_reduction <add>, %18, %cst_8 [0] : vector<8x64xf32> to vector<64xf32>
    %20 = vector.shape_cast %19 : vector<64xf32> to vector<1x64xf32>
    %cst_9 = arith.constant 8.000000e+00 : f32
    %21 = vector.broadcast %cst_9 : f32 to vector<1x64xf32>
    %22 = arith.divf %20, %21 : vector<1x64xf32>
    %23 = vector.broadcast %15 : vector<1x64xf32> to vector<8x64xf32>
    %24 = arith.subf %11, %23 : vector<8x64xf32>
    %cst_10 = arith.constant 9.99999974E-6 : f32
    %25 = vector.broadcast %cst_10 : f32 to vector<1x64xf32>
    %26 = arith.addf %22, %25 : vector<1x64xf32>
    %27 = math.rsqrt %26 : vector<1x64xf32>
    %28 = vector.broadcast %27 : vector<1x64xf32> to vector<8x64xf32>
    %29 = arith.mulf %24, %28 : vector<8x64xf32>
    %c0_11 = arith.constant 0 : index
    %c0_12 = arith.constant 0 : index
    %30 = vector.load %arg3[%c0_11, %c0_12] : memref<68x64xf32, #tpu.memory_space<vmem>>, vector<64x64xf32>
    %cst_13 = arith.constant dense<0.000000e+00> : vector<8x64xf32>
    %31 = tpu.matmul %29, %30, %cst_13 {dimension_numbers = #tpu.dot_dimension_numbers<[1], [0], [0], [1], [0, 0, 1, 1], [], []>} : vector<8x64xf32>, vector<64x64xf32>, vector<8x64xf32> -> vector<8x64xf32>
    %32 = vector.broadcast %2 : vector<1x64xf32> to vector<8x64xf32>
    %33 = arith.addf %31, %32 : vector<8x64xf32>
    %c0_14 = arith.constant 0 : index
    %c0_15 = arith.constant 0 : index
    %34 = vector.load %arg1[%c0_14, %c0_15] : memref<8x4xf32, #tpu.memory_space<vmem>>, vector<8x4xf32>
    %c64 = arith.constant 64 : index
    %c0_16 = arith.constant 0 : index
    %35 = vector.load %arg3[%c64, %c0_16] : memref<68x64xf32, #tpu.memory_space<vmem>>, vector<4x64xf32>
    %36 = vector.extract_strided_slice %34 {offsets = [0, 0], sizes = [8, 1], strides = [1, 1]} : vector<8x4xf32> to vector<8x1xf32>
    %37 = vector.extract_strided_slice %35 {offsets = [0, 0], sizes = [1, 64], strides = [1, 1]} : vector<4x64xf32> to vector<1x64xf32>
    %38 = vector.broadcast %36 : vector<8x1xf32> to vector<8x64xf32>
    %39 = vector.broadcast %37 : vector<1x64xf32> to vector<8x64xf32>
    %40 = arith.mulf %38, %39 : vector<8x64xf32>
    %41 = arith.addf %33, %40 : vector<8x64xf32>
    %42 = vector.extract_strided_slice %34 {offsets = [0, 1], sizes = [8, 1], strides = [1, 1]} : vector<8x4xf32> to vector<8x1xf32>
    %43 = vector.extract_strided_slice %35 {offsets = [1, 0], sizes = [1, 64], strides = [1, 1]} : vector<4x64xf32> to vector<1x64xf32>
    %44 = vector.broadcast %42 : vector<8x1xf32> to vector<8x64xf32>
    %45 = vector.broadcast %43 : vector<1x64xf32> to vector<8x64xf32>
    %46 = arith.mulf %44, %45 : vector<8x64xf32>
    %47 = arith.addf %41, %46 : vector<8x64xf32>
    %48 = vector.extract_strided_slice %34 {offsets = [0, 2], sizes = [8, 1], strides = [1, 1]} : vector<8x4xf32> to vector<8x1xf32>
    %49 = vector.extract_strided_slice %35 {offsets = [2, 0], sizes = [1, 64], strides = [1, 1]} : vector<4x64xf32> to vector<1x64xf32>
    %50 = vector.broadcast %48 : vector<8x1xf32> to vector<8x64xf32>
    %51 = vector.broadcast %49 : vector<1x64xf32> to vector<8x64xf32>
    %52 = arith.mulf %50, %51 : vector<8x64xf32>
    %53 = arith.addf %47, %52 : vector<8x64xf32>
    %54 = vector.extract_strided_slice %34 {offsets = [0, 3], sizes = [8, 1], strides = [1, 1]} : vector<8x4xf32> to vector<8x1xf32>
    %55 = vector.extract_strided_slice %35 {offsets = [3, 0], sizes = [1, 64], strides = [1, 1]} : vector<4x64xf32> to vector<1x64xf32>
    %56 = vector.broadcast %54 : vector<8x1xf32> to vector<8x64xf32>
    %57 = vector.broadcast %55 : vector<1x64xf32> to vector<8x64xf32>
    %58 = arith.mulf %56, %57 : vector<8x64xf32>
    %59 = arith.addf %53, %58 : vector<8x64xf32>
    %cst_17 = arith.constant 0.000000e+00 : f32
    %60 = vector.broadcast %cst_17 : f32 to vector<8x64xf32>
    %61 = arith.maximumf %59, %60 : vector<8x64xf32>
    %62 = vector.broadcast %3 : vector<1x64xf32> to vector<8x64xf32>
    %63 = arith.mulf %61, %62 : vector<8x64xf32>
    %cst_18 = arith.constant dense<0.000000e+00> : vector<8xf32>
    %64 = vector.multi_reduction <add>, %63, %cst_18 [1] : vector<8x64xf32> to vector<8xf32>
    %65 = vector.shape_cast %64 : vector<8xf32> to vector<8x1xf32>
    %66 = vector.broadcast %4 : vector<1x1xf32> to vector<8x1xf32>
    %67 = arith.addf %65, %66 : vector<8x1xf32>
    %c0_19 = arith.constant 0 : index
    %c0_20 = arith.constant 0 : index
    %68 = vector.load %arg5[%c0_19, %c0_20] : memref<8x1xf32, #tpu.memory_space<vmem>>, vector<8x1xf32>
    tpu.vector_store %arg5[%c0_19, %c0_20], %67 {strides = array<i32>} : memref<8x1xf32, #tpu.memory_space<vmem>>, vector<8x1xf32>,
    return
  }
}

</mosaic_0001>

<llo_original>
// kernel: tpu_custom_call.1
$region0: #{tpu_custom_call.1}
  #allocation0 [shape = 'u32[]', space=smem, size = 0x4, offset = 0x4, fixed_abs, tag = 'smem constant byte address 0x4 - core index']
  #allocation1 [shape = 'u32[72,128]{1,0:T(1,128)}', space=vmem, size = 0x9000, scoped, tag = 'internal scratch']
  %s0 = inlined_call_operand.vmem [shape: f32[8,16], index: 0, kind: input, shape index: {}]
  %s1 = inlined_call_operand.vmem [shape: f32[8,4], index: 1, kind: input, shape index: {}]
  %s2 = inlined_call_operand.vmem [shape: f32[16,64], index: 2, kind: input, shape index: {}]
  %s3 = inlined_call_operand.vmem [shape: f32[68,64], index: 3, kind: input, shape index: {}]
  %s4 = inlined_call_operand.vmem [shape: f32[4,64], index: 4, kind: input, shape index: {}]
  %s5 = inlined_call_operand.vmem [shape: f32[8,1], index: 5, kind: output, shape index: {}]
  %s6 = sld [smem:[#allocation0]]
  $region30: #{tpu_custom_call.1} parent=0
    _
  %s8 = ssub.s32 1, %s6
  %s9 = scalar_select 0, %s8, %s6
  // Predicated region
  $region2: #{tpu_custom_call.1} parent=0 // pred_check
    _
  $region3: #{tpu_custom_call.1} parent=0 // pred_check_branch
    %11 = sbr.rel (0) target = $region5
  $region4: #{tpu_custom_call.1} parent=0 // pred_region
    _
  $region5: #{tpu_custom_call.1} parent=0 // pred_fallthru
    _
  // Predicated region
  $region6: #{tpu_custom_call.1} parent=0 // pred_check
    _
  $region7: #{tpu_custom_call.1} parent=0 // pred_check_branch
    %13 = sbr.rel (0) target = $region9
  $region8: #{tpu_custom_call.1} parent=0 // pred_region
    _
  $region9: #{tpu_custom_call.1} parent=0 // pred_fallthru
    _
  // Predicated region
  $region10: #{tpu_custom_call.1} parent=0 // pred_check
    _
  $region11: #{tpu_custom_call.1} parent=0 // pred_check_branch
    %15 = sbr.rel (0) target = $region13
  $region12: #{tpu_custom_call.1} parent=0 // pred_region
    _
  $region13: #{tpu_custom_call.1} parent=0 // pred_fallthru
    _
  // Predicated region
  $region14: #{tpu_custom_call.1} parent=0 // pred_check
    _
  $region15: #{tpu_custom_call.1} parent=0 // pred_check_branch
    %17 = sbr.rel (0) target = $region17
  $region16: #{tpu_custom_call.1} parent=0 // pred_region
    _
  $region17: #{tpu_custom_call.1} parent=0 // pred_fallthru
    _
  // Predicated region
  $region18: #{tpu_custom_call.1} parent=0 // pred_check
    _
  $region19: #{tpu_custom_call.1} parent=0 // pred_check_branch
    %19 = sbr.rel (0) target = $region21
  $region20: #{tpu_custom_call.1} parent=0 // pred_region
    _
  $region21: #{tpu_custom_call.1} parent=0 // pred_fallthru
    _
  %v20 = vld [vmem:[%s4] sm:$0xf]
  %v21 = vld [vmem:[%s0] sm:$0xff]
  %v22 = vld [vmem:[%s2] sm:$0xff]
  %v23 = vld [vmem:[%s2 + $0x8] sm:$0xff]
  %v24 = vperm.slane %v20, 0
  %vm25 = vcmask 130048
  %v27 = vsel %vm25, %v21, 0
  %29 = vmatpush.msra.mxu0 0.0
  %30 = vmatpush.msra.mxu0 0.0
  %31 = vmatpush.msra.mxu0 0.0
  %32 = vmatpush.msra.mxu0 0.0
  %33 = vmatpush.msra.mxu0 0.0
  %34 = vmatpush.msra.mxu0 0.0
  %35 = vmatpush.msra.mxu0 0.0
  %36 = vmatpush.msra.mxu0 0.0
  %37 = vmatpush.msra.mxu0 0.0
  %38 = vmatpush.msra.mxu0 0.0
  %39 = vmatpush.msra.mxu0 0.0
  %40 = vmatpush.msra.mxu0 0.0
  %41 = vmatpush.msra.mxu0 0.0
  %42 = vmatpush.msra.mxu0 0.0
  %43 = vmatpush.msra.mxu0 %v23
  %44 = vmatpush.msra.mxu0 %v22
  %45 = vmatmul.f32.gmra.mxu0 %v27
  %v46 = vpop.f32.mrf.mxu0
  %v47 = vadd.f32 %v24, %v46
  %48 = vdwg.mxu0
  %v49 = vmax.f32 %v47, 0.0
  %vm50 = vcmask 523264
  %v51 = vsel %vm50, %v49, 0.0
  %v52 = vrot.slane %v51, 4
  %v53 = vadd.f32 %v51, %v52
  %v54 = vrot.slane %v53, 2
  %v55 = vadd.f32 %v53, %v54
  %v56 = vrot.slane %v55, 1
  %v57 = vadd.f32 %v55, %v56
  %v58 = vrcp.pop 8.0
  %v59 = vmul.f32 8.0, %v58
  %v60 = vsub.f32 1.0, %v59
  %v61 = vmul.f32 %v58, %v60
  %v62 = vadd.f32 %v58, %v61
  %vm63 = vweird.f32 %v58
  %v64 = vsel %vm63, %v58, %v62
  %v65 = vmul.f32 %v57, %v64
  %v66 = vsub.f32 %v49, %v65
  %v67 = vmul.f32 %v66, %v66
  %v68 = vsel %vm50, %v67, 0.0
  %v69 = vrot.slane %v68, 4
  %v70 = vadd.f32 %v68, %v69
  %v71 = vrot.slane %v70, 2
  %v72 = vadd.f32 %v70, %v71
  %v73 = vrot.slane %v72, 1
  %v74 = vadd.f32 %v72, %v73
  %v75 = vmul.f32 %v74, %v64
  %v76 = vadd.f32 %v75, 1e-05
  %v77 = vrsqrt.pop %v76
  %v78 = vmul.f32 %v77, %v76
  %v79 = vmul.f32 %v78, %v77
  %v80 = vmul.f32 0.5, %v79
  %v81 = vsub.f32 1.5, %v80
  %v82 = vmul.f32 %v77, %v81
  %vm83 = vweird.f32 %v76
  %vm84 = vweird.f32 %v77
  %vm85 = vmor %vm83, %vm84
  %v86 = vsel %vm85, %v77, %v82
  %v87 = vmul.f32 %v66, %v86
  %v88 = vld [vmem:[%s3] sm:$0xff]
  %v89 = vld [vmem:[%s3 + $0x8] sm:$0xff]
  %v90 = vld [vmem:[%s3 + $0x10] sm:$0xff]
  %v91 = vld [vmem:[%s3 + $0x18] sm:$0xff]
  %v92 = vld [vmem:[%s3 + $0x20] sm:$0xff]
  %v93 = vld [vmem:[%s3 + $0x28] sm:$0xff]
  %v94 = vld [vmem:[%s3 + $0x30] sm:$0xff]
  %v95 = vld [vmem:[%s3 + $0x38] sm:$0xff]
  %v96 = vperm.slane %v20, 1
  %v98 = vsel %vm50, %v87, 0
  %100 = vmatpush.msra.mxu0 0.0
  %101 = vmatpush.msra.mxu0 0.0
  %102 = vmatpush.msra.mxu0 0.0
  %103 = vmatpush.msra.mxu0 0.0
  %104 = vmatpush.msra.mxu0 0.0
  %105 = vmatpush.msra.mxu0 0.0
  %106 = vmatpush.msra.mxu0 0.0
  %107 = vmatpush.msra.mxu0 0.0
  %108 = vmatpush.msra.mxu0 %v95
  %109 = vmatpush.msra.mxu0 %v94
  %110 = vmatpush.msra.mxu0 %v93
  %111 = vmatpush.msra.mxu0 %v92
  %112 = vmatpush.msra.mxu0 %v91
  %113 = vmatpush.msra.mxu0 %v90
  %114 = vmatpush.msra.mxu0 %v89
  %115 = vmatpush.msra.mxu0 %v88
  %116 = vmatmul.f32.gmra.mxu0 %v98
  %v117 = vpop.f32.mrf.mxu0
  %v118 = vadd.f32 %v96, %v117
  %119 = vdwg.mxu0
  %v120 = vld [vmem:[%s1] sm:$0xff]
  %v121 = vld [vmem:[%s3 + $0x40] sm:$0xf]
  %123 = vset.pattern.permute.xlu0 0
  %124 = vperm.xlu0 %123, %v120
  %v125 = vpop.permute.xlu0 %124
  %v127 = vperm.slane %v121, 0
  %v128 = vmul.f32 %v125, %v127
  %v129 = vadd.f32 %v118, %v128
  %130 = vset.pattern.permute.xlu0 1
  %131 = vperm.xlu0 %130, %v120
  %v132 = vpop.permute.xlu0 %131
  %v134 = vperm.slane %v121, 1
  %v135 = vmul.f32 %v132, %v134
  %v136 = vadd.f32 %v129, %v135
  %137 = vset.pattern.permute.xlu0 2
  %138 = vperm.xlu0 %137, %v120
  %v139 = vpop.permute.xlu0 %138
  %v141 = vperm.slane %v121, 2
  %v142 = vmul.f32 %v139, %v141
  %v143 = vadd.f32 %v136, %v142
  %144 = vset.pattern.permute.xlu0 3
  %145 = vperm.xlu0 %144, %v120
  %v146 = vpop.permute.xlu0 %145
  %v148 = vperm.slane %v121, 3
  %v149 = vmul.f32 %v146, %v148
  %v150 = vadd.f32 %v143, %v149
  %v151 = vmax.f32 %v150, 0.0
  %v152 = vperm.slane %v20, 2
  %v153 = vmul.f32 %v151, %v152
  %v154 = vsel %vm50, %v153, 0.0
  %155 = vadd.xlane.f32.xlu0 %v154
  %v156 = vpop.xlane.xlu0 %155
  %v157 = vperm.slane %v20, 3
  %v158 = vadd.f32 %v156, %v157
  %vm159 = vcmask 7168
  %160 = vst.msk [vmem:[%s5] sm:$0xff] %vm159, %v158
  // Predicated region
  $region22: #{tpu_custom_call.1} parent=0 // pred_check
    _
  $region23: #{tpu_custom_call.1} parent=0 // pred_check_branch
    %162 = sbr.rel (0) target = $region25
  $region24: #{tpu_custom_call.1} parent=0 // pred_region
    _
  $region25: #{tpu_custom_call.1} parent=0 // pred_fallthru
    _
  // Predicated region
  $region26: #{tpu_custom_call.1} parent=0 // pred_check
    _
  $region27: #{tpu_custom_call.1} parent=0 // pred_check_branch
    %164 = sbr.rel (0) target = $region29
  $region28: #{tpu_custom_call.1} parent=0 // pred_region
    _
  $region29: #{tpu_custom_call.1} parent=0 // pred_fallthru
    _

</llo_original>
